<compile_context>
chip_gen: v7x
topology: tpu7x:2x2x1
jax: 0.10.0
libtpu: 0.0.40
codegen_flags: <defaults>
</compile_context>

<pallas_src>
import jax
import jax.numpy as jnp
from jax.experimental import pallas as pl
from jax.experimental.pallas import tpu as pltpu


def _mlp_kernel(x_ref, w1_ref, b1_ref, w2_ref, b2_ref, o_ref):
    # Biases loaded once per grid step (hoisted; no re-broadcast inside loops).
    b1 = b1_ref[...]                      # (1, H_p)  broadcasts over rows
    b2 = b2_ref[...]                      # (1, D_out_p)

    # linear1: (tile_n, D_in_p) @ (D_in_p, H_p) + b1, then sigmoid (EUP path).
    h = jnp.dot(x_ref[...], w1_ref[...], preferred_element_type=jnp.float32)
    h = jax.nn.sigmoid(h + b1)

    # linear2: (tile_n, H_p) @ (H_p, D_out_p) + b2.
    y = jnp.dot(h, w2_ref[...], preferred_element_type=jnp.float32) + b2
    o_ref[...] = y.astype(o_ref.dtype)


def _round_up(x, m):
    return ((x + m - 1) // m) * m


def _pad_to(a, shape):
    pads = [(0, s - d) for d, s in zip(a.shape, shape)]
    if all(p == (0, 0) for p in pads):
        return a
    return jnp.pad(a, pads)


def net_forward(x, w1, b1, w2, b2, *, tile_n=512):
    """x: (N, D_in) f32; w1: (D_in, H); b1: (H,); w2: (H, D_out); b2: (D_out,)."""
    N, D_in = x.shape
    H = w1.shape[1]
    D_out = w2.shape[1]

    # Lane-dense padded dims (multiples of 128 on the lane axis).
    D_in_p = _round_up(D_in, 128)
    H_p = _round_up(H, 128)
    D_out_p = _round_up(D_out, 128)

    # Zero-pad weights / biases once (cheap: < 100 KiB total).
    w1_p = _pad_to(w1, (D_in_p, H_p))
    b1_p = _pad_to(b1.reshape(1, H), (1, H_p))
    w2_p = _pad_to(w2, (H_p, D_out_p))
    b2_p = _pad_to(b2.reshape(1, D_out), (1, D_out_p))

    if N <= tile_n:
        # Small batch: no grid at all — whole arrays resident in VMEM,
        # zero per-grid-step pipeline overhead.
        N_p = _round_up(N, 8)
        x_p = _pad_to(x, (N_p, D_in_p))
        out = pl.pallas_call(
            _mlp_kernel,
            out_shape=jax.ShapeDtypeStruct((N_p, D_out_p), x.dtype),
        )(x_p, w1_p, b1_p, w2_p, b2_p)
    else:
        # Large batch: tile over N; weights stay VMEM-resident (constant
        # index_map => DMA'd once), x/output tiles are pipelined, and the
        # batch axis is "parallel" so v7x's two TensorCores split it.
        N_p = _round_up(N, tile_n)
        x_p = _pad_to(x, (N_p, D_in_p))
        grid = (N_p // tile_n,)
        out = pl.pallas_call(
            _mlp_kernel,
            out_shape=jax.ShapeDtypeStruct((N_p, D_out_p), x.dtype),
            grid=grid,
            in_specs=[
                pl.BlockSpec((tile_n, D_in_p), lambda i: (i, 0)),
                pl.BlockSpec((D_in_p, H_p), lambda i: (0, 0)),
                pl.BlockSpec((1, H_p), lambda i: (0, 0)),
                pl.BlockSpec((H_p, D_out_p), lambda i: (0, 0)),
                pl.BlockSpec((1, D_out_p), lambda i: (0, 0)),
            ],
            out_specs=pl.BlockSpec((tile_n, D_out_p), lambda i: (i, 0)),
            compiler_params=pltpu.CompilerParams(
                dimension_semantics=("parallel",),
            ),
        )(x_p, w1_p, b1_p, w2_p, b2_p)

    # Slice away the padded rows/columns.
    return out[:N, :D_out]


def init_params(key, D_in, H, D_out):
    """Deterministic init matching nn.Linear shapes (weights pre-transposed)."""
    k1, k2, k3, k4 = jax.random.split(key, 4)
    lim1 = 1.0 / jnp.sqrt(D_in)
    lim2 = 1.0 / jnp.sqrt(H)
    w1 = jax.random.uniform(k1, (D_in, H), jnp.float32, -lim1, lim1)
    b1 = jax.random.uniform(k2, (H,), jnp.float32, -lim1, lim1)
    w2 = jax.random.uniform(k3, (H, D_out), jnp.float32, -lim2, lim2)
    b2 = jax.random.uniform(k4, (D_out,), jnp.float32, -lim2, lim2)
    return w1, b1, w2, b2


def _reference(x, w1, b1, w2, b2):
    return jax.nn.sigmoid(x @ w1 + b1) @ w2 + b2


if __name__ == "__main__":
    key = jax.random.PRNGKey(0)
    kx, kp, kx2 = jax.random.split(key, 3)

    # Small shape matching the module spec (same as before).
    N, D_in, H, D_out = 8, 32, 64, 16
    x = jax.random.normal(kx, (N, D_in), jnp.float32)
    w1, b1, w2, b2 = init_params(kp, D_in, H, D_out)

    y = net_forward(x, w1, b1, w2, b2)
    jax.block_until_ready(y)
    ref = _reference(x, w1, b1, w2, b2)
    assert y.shape == (N, D_out)
    assert jnp.allclose(y, ref, atol=1e-5, rtol=1e-5)

    # Also exercise the tiled (large-N) path once to validate it end to end.
    N_big = 1024
    x_big = jax.random.normal(kx2, (N_big, D_in), jnp.float32)
    y_big = net_forward(x_big, w1, b1, w2, b2, tile_n=256)
    jax.block_until_ready(y_big)
    ref_big = _reference(x_big, w1, b1, w2, b2)
    assert y_big.shape == (N_big, D_out)
    assert jnp.allclose(y_big, ref_big, atol=1e-5, rtol=1e-5)

    print("KERNEL_OK")
</pallas_src>

<mosaic_0001>
module attributes {stable_mosaic.version = 11 : i64} {
  func.func @_mlp_kernel(%arg0: memref<8x128xf32, #tpu.memory_space<vmem>>, %arg1: memref<128x128xf32, #tpu.memory_space<vmem>>, %arg2: memref<1x128xf32, #tpu.memory_space<vmem>>, %arg3: memref<128x128xf32, #tpu.memory_space<vmem>>, %arg4: memref<1x128xf32, #tpu.memory_space<vmem>>, %arg5: memref<8x128xf32, #tpu.memory_space<vmem>>) attributes {dimension_semantics = [], scalar_prefetch = 0 : i64, scratch_operands = 0 : i64, tpu.core_type = #tpu.core_type<tc>} {
    %c0 = arith.constant 0 : index
    %c0_0 = arith.constant 0 : index
    %0 = vector.load %arg2[%c0, %c0_0] : memref<1x128xf32, #tpu.memory_space<vmem>>, vector<1x128xf32>
    %c0_1 = arith.constant 0 : index
    %c0_2 = arith.constant 0 : index
    %1 = vector.load %arg4[%c0_1, %c0_2] : memref<1x128xf32, #tpu.memory_space<vmem>>, vector<1x128xf32>
    %c0_3 = arith.constant 0 : index
    %c0_4 = arith.constant 0 : index
    %2 = vector.load %arg0[%c0_3, %c0_4] : memref<8x128xf32, #tpu.memory_space<vmem>>, vector<8x128xf32>
    %c0_5 = arith.constant 0 : index
    %c0_6 = arith.constant 0 : index
    %3 = vector.load %arg1[%c0_5, %c0_6] : memref<128x128xf32, #tpu.memory_space<vmem>>, vector<128x128xf32>
    %cst = arith.constant dense<0.000000e+00> : vector<8x128xf32>
    %4 = tpu.matmul %2, %3, %cst {dimension_numbers = #tpu.dot_dimension_numbers<[1], [0], [0], [1], [0, 0, 1, 1], [], []>} : vector<8x128xf32>, vector<128x128xf32>, vector<8x128xf32> -> vector<8x128xf32>
    %5 = vector.broadcast %0 : vector<1x128xf32> to vector<8x128xf32>
    %6 = arith.addf %4, %5 : vector<8x128xf32>
    %7 = arith.negf %6 : vector<8x128xf32>
    %8 = math.exp %7 : vector<8x128xf32>
    %cst_7 = arith.constant 1.000000e+00 : f32
    %9 = vector.broadcast %cst_7 : f32 to vector<8x128xf32>
    %10 = arith.addf %9, %8 : vector<8x128xf32>
    %11 = arith.divf %9, %10 : vector<8x128xf32>
    %c0_8 = arith.constant 0 : index
    %c0_9 = arith.constant 0 : index
    %12 = vector.load %arg3[%c0_8, %c0_9] : memref<128x128xf32, #tpu.memory_space<vmem>>, vector<128x128xf32>
    %cst_10 = arith.constant dense<0.000000e+00> : vector<8x128xf32>
    %13 = tpu.matmul %11, %12, %cst_10 {dimension_numbers = #tpu.dot_dimension_numbers<[1], [0], [0], [1], [0, 0, 1, 1], [], []>} : vector<8x128xf32>, vector<128x128xf32>, vector<8x128xf32> -> vector<8x128xf32>
    %14 = vector.broadcast %1 : vector<1x128xf32> to vector<8x128xf32>
    %15 = arith.addf %13, %14 : vector<8x128xf32>
    %c0_11 = arith.constant 0 : index
    %c0_12 = arith.constant 0 : index
    %16 = vector.load %arg5[%c0_11, %c0_12] : memref<8x128xf32, #tpu.memory_space<vmem>>, vector<8x128xf32>
    tpu.vector_store %arg5[%c0_11, %c0_12], %15 {strides = array<i32>} : memref<8x128xf32, #tpu.memory_space<vmem>>, vector<8x128xf32>,
    return
  }
}

</mosaic_0001>

<llo_original>
// kernel: tpu_custom_call.1
$region0: #{tpu_custom_call.1}
  #allocation0 [shape = 'u32[]', space=smem, size = 0x4, offset = 0x4, fixed_abs, tag = 'smem constant byte address 0x4 - core index']
  #allocation1 [shape = 'u32[144,128]{1,0:T(1,128)}', space=vmem, size = 0x12000, scoped, tag = 'internal scratch']
  %s0 = inlined_call_operand.hbm [shape: f32[8,128], index: 0, kind: input, shape index: {}]
  %s1 = inlined_call_operand.hbm [shape: f32[128,128], index: 1, kind: input, shape index: {}]
  %s2 = inlined_call_operand.vmem [shape: f32[1,128], index: 2, kind: input, shape index: {}]
  %s3 = inlined_call_operand.hbm [shape: f32[128,128], index: 3, kind: input, shape index: {}]
  %s4 = inlined_call_operand.vmem [shape: f32[1,128], index: 4, kind: input, shape index: {}]
  %s5 = inlined_call_operand.hbm [shape: f32[8,128], index: 5, kind: output, shape index: {}]
  %s6 = sld [smem:[#allocation0]]
  $region42: #{tpu_custom_call.1} parent=0
    _
  %s8 = ssub.s32 1, %s6
  %s9 = scalar_select 0, %s8, %s6
  $region1: #{tpu_custom_call.1} parent=0
    #allocation2 [shape = 'u8[4096]{0}', space=vmem, size = 0x1000, scoped, tag = 'input window, operand 0, single buffered']
    #allocation3 [shape = 's32[1]{0}', space=sflag, size = 0x4, scoped, tag = 'scoped memory for tpu_custom_call.1']
    #allocation4 [shape = 's32[1]{0}', space=sflag, size = 0x4, scoped, tag = 'scoped memory for tpu_custom_call.1']
    #allocation5 [shape = 'u8[65536]{0}', space=vmem, size = 0x10000, scoped, tag = 'input window, operand 1, single buffered']
    #allocation6 [shape = 's32[1]{0}', space=sflag, size = 0x4, scoped, tag = 'scoped memory for tpu_custom_call.1']
    #allocation7 [shape = 'u8[65536]{0}', space=vmem, size = 0x10000, scoped, tag = 'input window, operand 3, single buffered']
    #allocation8 [shape = 'u8[4096]{0}', space=vmem, size = 0x1000, scoped, tag = 'output window, operand 0, single buffered']
    %10 = vsyncpa [#allocation3], 0
    %11 = vsyncpa [#allocation6], 0
    %12 = vsyncpa [#allocation4], 0
    // Predicated region
    $region2: #{tpu_custom_call.1} parent=1 // pred_check
      _
    $region3: #{tpu_custom_call.1} parent=1 // pred_check_branch
      %14 = sbr.rel (0) target = $region5
    $region4: #{tpu_custom_call.1} parent=1 // pred_region
      %s16 = ssub.s32 128, 128
      %17 = vsyncadd [#allocation3], %s16
      %s19 = sshll.u32 [#allocation2], 4
      %s20 = int_to_ptr.vmem [resolvable:$true] %s19
      %22 = dma.hbm_to_vmem [thread:$0]  %s0, 128, %s20, [#allocation3]
    $region5: #{tpu_custom_call.1} parent=1 // pred_fallthru
      _
    // Predicated region
    $region6: #{tpu_custom_call.1} parent=1 // pred_check
      _
    $region7: #{tpu_custom_call.1} parent=1 // pred_check_branch
      %24 = sbr.rel (0) target = $region9
    $region8: #{tpu_custom_call.1} parent=1 // pred_region
      %s26 = ssub.s32 2048, 2048
      %27 = vsyncadd [#allocation6], %s26
      %s28 = sshll.u32 [#allocation5], 4
      %s29 = int_to_ptr.vmem [resolvable:$true] %s28
      %34 = dma.hbm_to_vmem [thread:$0]  %s1, 2048, %s29, [#allocation6], 128, 128, 8
    $region9: #{tpu_custom_call.1} parent=1 // pred_fallthru
      _
    // Predicated region
    $region10: #{tpu_custom_call.1} parent=1 // pred_check
      _
    $region11: #{tpu_custom_call.1} parent=1 // pred_check_branch
      %36 = sbr.rel (0) target = $region13
    $region12: #{tpu_custom_call.1} parent=1 // pred_region
      _
    $region13: #{tpu_custom_call.1} parent=1 // pred_fallthru
      _
    // Predicated region
    $region14: #{tpu_custom_call.1} parent=1 // pred_check
      _
    $region15: #{tpu_custom_call.1} parent=1 // pred_check_branch
      %38 = sbr.rel (0) target = $region17
    $region16: #{tpu_custom_call.1} parent=1 // pred_region
      %s40 = ssub.s32 2048, 2048
      %41 = vsyncadd [#allocation6], %s40
      %s42 = sshll.u32 [#allocation7], 4
      %s43 = int_to_ptr.vmem [resolvable:$true] %s42
      %48 = dma.hbm_to_vmem [thread:$0]  %s3, 2048, %s43, [#allocation6], 128, 128, 8
    $region17: #{tpu_custom_call.1} parent=1 // pred_fallthru
      _
    // Predicated region
    $region18: #{tpu_custom_call.1} parent=1 // pred_check
      _
    $region19: #{tpu_custom_call.1} parent=1 // pred_check_branch
      %50 = sbr.rel (0) target = $region21
    $region20: #{tpu_custom_call.1} parent=1 // pred_region
      _
    $region21: #{tpu_custom_call.1} parent=1 // pred_fallthru
      _
    // Predicated region
    $region22: #{tpu_custom_call.1} parent=1 // pred_check
      _
    $region23: #{tpu_custom_call.1} parent=1 // pred_check_branch
      %52 = sbr.rel (0) target = $region25
    $region24: #{tpu_custom_call.1} parent=1 // pred_region
      %53 = dma.done [#allocation3], 128
    $region25: #{tpu_custom_call.1} parent=1 // pred_fallthru
      _
    // Predicated region
    $region26: #{tpu_custom_call.1} parent=1 // pred_check
      _
    $region27: #{tpu_custom_call.1} parent=1 // pred_check_branch
      %55 = sbr.rel (0) target = $region29
    $region28: #{tpu_custom_call.1} parent=1 // pred_region
      %56 = dma.done [#allocation6], 2048
    $region29: #{tpu_custom_call.1} parent=1 // pred_fallthru
      _
    // Predicated region
    $region30: #{tpu_custom_call.1} parent=1 // pred_check
      _
    $region31: #{tpu_custom_call.1} parent=1 // pred_check_branch
      %58 = sbr.rel (0) target = $region33
    $region32: #{tpu_custom_call.1} parent=1 // pred_region
      %59 = dma.done [#allocation6], 2048
    $region33: #{tpu_custom_call.1} parent=1 // pred_fallthru
      _
    %v60 = vld [vmem:[%s2] sm:$0x1]
    %v61 = vld [vmem:[%s4] sm:$0x1]
    %v62 = vld [vmem:[#allocation2] sm:$0xff]
    %v63 = vld [vmem:[#allocation5] sm:$0xff]
    %v64 = vld [vmem:[#allocation5 + $0x8] sm:$0xff]
    %v65 = vld [vmem:[#allocation5 + $0x10] sm:$0xff]
    %v66 = vld [vmem:[#allocation5 + $0x18] sm:$0xff]
    %v67 = vld [vmem:[#allocation5 + $0x20] sm:$0xff]
    %v68 = vld [vmem:[#allocation5 + $0x28] sm:$0xff]
    %v69 = vld [vmem:[#allocation5 + $0x30] sm:$0xff]
    %v70 = vld [vmem:[#allocation5 + $0x38] sm:$0xff]
    %v71 = vld [vmem:[#allocation5 + $0x40] sm:$0xff]
    %v72 = vld [vmem:[#allocation5 + $0x48] sm:$0xff]
    %v73 = vld [vmem:[#allocation5 + $0x50] sm:$0xff]
    %v74 = vld [vmem:[#allocation5 + $0x58] sm:$0xff]
    %v75 = vld [vmem:[#allocation5 + $0x60] sm:$0xff]
    %v76 = vld [vmem:[#allocation5 + $0x68] sm:$0xff]
    %v77 = vld [vmem:[#allocation5 + $0x70] sm:$0xff]
    %v78 = vld [vmem:[#allocation5 + $0x78] sm:$0xff]
    %v80 = vlaneseq
    %v81 = vshrl.u32 %v80, 7
    %v82 = vsub.s32 0, %v81
    %v83 = vrot.slane %v60, %v82
    %85 = vmatprep.subr.mxu0 0.0
    %86 = vmatpush1.msra.mxu0 %v63
    %87 = vmatprep.subr.mxu0 0.0
    %88 = vmatpush1.msra.mxu0 %v64
    %89 = vmatprep.subr.mxu0 0.0
    %90 = vmatpush1.msra.mxu0 %v65
    %91 = vmatprep.subr.mxu0 0.0
    %92 = vmatpush1.msra.mxu0 %v66
    %93 = vmatprep.subr.mxu0 0.0
    %94 = vmatpush1.msra.mxu0 %v67
    %95 = vmatprep.subr.mxu0 0.0
    %96 = vmatpush1.msra.mxu0 %v68
    %97 = vmatprep.subr.mxu0 0.0
    %98 = vmatpush1.msra.mxu0 %v69
    %99 = vmatprep.subr.mxu0 0.0
    %100 = vmatpush1.msra.mxu0 %v70
    %101 = vmatprep.subr.mxu0 0.0
    %102 = vmatpush1.msra.mxu0 %v71
    %103 = vmatprep.subr.mxu0 0.0
    %104 = vmatpush1.msra.mxu0 %v72
    %105 = vmatprep.subr.mxu0 0.0
    %106 = vmatpush1.msra.mxu0 %v73
    %107 = vmatprep.subr.mxu0 0.0
    %108 = vmatpush1.msra.mxu0 %v74
    %109 = vmatprep.subr.mxu0 0.0
    %110 = vmatpush1.msra.mxu0 %v75
    %111 = vmatprep.subr.mxu0 0.0
    %112 = vmatpush1.msra.mxu0 %v76
    %113 = vmatprep.subr.mxu0 0.0
    %114 = vmatpush1.msra.mxu0 %v77
    %115 = vmatprep.subr.mxu0 0.0
    %116 = vmatpush1.msra.mxu0 %v78
    %117 = vmatprep.subr.mxu0 0.0
    %118 = vmatpush1.msra.mxu0 0.0
    %119 = vmatprep.subr.mxu0 0.0
    %120 = vmatpush1.msra.mxu0 0.0
    %121 = vmatprep.subr.mxu0 0.0
    %122 = vmatpush1.msra.mxu0 0.0
    %123 = vmatprep.subr.mxu0 0.0
    %124 = vmatpush1.msra.mxu0 0.0
    %125 = vmatprep.subr.mxu0 0.0
    %126 = vmatpush1.msra.mxu0 0.0
    %127 = vmatprep.subr.mxu0 0.0
    %128 = vmatpush1.msra.mxu0 0.0
    %129 = vmatprep.subr.mxu0 0.0
    %130 = vmatpush1.msra.mxu0 0.0
    %131 = vmatprep.subr.mxu0 0.0
    %132 = vmatpush1.msra.mxu0 0.0
    %133 = vmatprep.subr.mxu0 0.0
    %134 = vmatpush1.msra.mxu0 0.0
    %135 = vmatprep.subr.mxu0 0.0
    %136 = vmatpush1.msra.mxu0 0.0
    %137 = vmatprep.subr.mxu0 0.0
    %138 = vmatpush1.msra.mxu0 0.0
    %139 = vmatprep.subr.mxu0 0.0
    %140 = vmatpush1.msra.mxu0 0.0
    %141 = vmatprep.subr.mxu0 0.0
    %142 = vmatpush1.msra.mxu0 0.0
    %143 = vmatprep.subr.mxu0 0.0
    %144 = vmatpush1.msra.mxu0 0.0
    %145 = vmatprep.subr.mxu0 0.0
    %146 = vmatpush1.msra.mxu0 0.0
    %147 = vmatprep.subr.mxu0 0.0
    %148 = vmatpush1.msra.mxu0 0.0
    %149 = vmatprep.mubr.f32.mxu0 0.0
    %150 = vmatmul.mubr.f32.gmra.mrb[0].mxu0 %v62
    %v151 = vpop.f32.mrb[0].mxu0
    %v152 = vadd.f32 %v83, %v151
    %v153 = vpop.f32.mrb[0].mxu0
    %154 = vdwg.mxu0
    %v155 = vxor.u32 %v152, 2147483648
    %v156 = vmul.f32 %v155, 1.442695
    %v157 = vpow.pop %v156
    %v158 = vadd.f32 %v157, 1.0
    %v159 = vrcp.pop %v158
    %v160 = vmul.f32 1.0, %v159
    %v161 = vld [vmem:[#allocation7] sm:$0xff]
    %v162 = vld [vmem:[#allocation7 + $0x8] sm:$0xff]
    %v163 = vld [vmem:[#allocation7 + $0x10] sm:$0xff]
    %v164 = vld [vmem:[#allocation7 + $0x18] sm:$0xff]
    %v165 = vld [vmem:[#allocation7 + $0x20] sm:$0xff]
    %v166 = vld [vmem:[#allocation7 + $0x28] sm:$0xff]
    %v167 = vld [vmem:[#allocation7 + $0x30] sm:$0xff]
    %v168 = vld [vmem:[#allocation7 + $0x38] sm:$0xff]
    %v169 = vld [vmem:[#allocation7 + $0x40] sm:$0xff]
    %v170 = vld [vmem:[#allocation7 + $0x48] sm:$0xff]
    %v171 = vld [vmem:[#allocation7 + $0x50] sm:$0xff]
    %v172 = vld [vmem:[#allocation7 + $0x58] sm:$0xff]
    %v173 = vld [vmem:[#allocation7 + $0x60] sm:$0xff]
    %v174 = vld [vmem:[#allocation7 + $0x68] sm:$0xff]
    %v175 = vld [vmem:[#allocation7 + $0x70] sm:$0xff]
    %v176 = vld [vmem:[#allocation7 + $0x78] sm:$0xff]
    %v178 = vlaneseq
    %v179 = vshrl.u32 %v178, 7
    %v180 = vsub.s32 0, %v179
    %v181 = vrot.slane %v61, %v180
    %183 = vmatprep.subr.mxu0 0.0
    %184 = vmatpush1.msra.mxu0 %v161
    %185 = vmatprep.subr.mxu0 0.0
    %186 = vmatpush1.msra.mxu0 %v162
    %187 = vmatprep.subr.mxu0 0.0
    %188 = vmatpush1.msra.mxu0 %v163
    %189 = vmatprep.subr.mxu0 0.0
    %190 = vmatpush1.msra.mxu0 %v164
    %191 = vmatprep.subr.mxu0 0.0
    %192 = vmatpush1.msra.mxu0 %v165
    %193 = vmatprep.subr.mxu0 0.0
    %194 = vmatpush1.msra.mxu0 %v166
    %195 = vmatprep.subr.mxu0 0.0
    %196 = vmatpush1.msra.mxu0 %v167
    %197 = vmatprep.subr.mxu0 0.0
    %198 = vmatpush1.msra.mxu0 %v168
    %199 = vmatprep.subr.mxu0 0.0
    %200 = vmatpush1.msra.mxu0 %v169
    %201 = vmatprep.subr.mxu0 0.0
    %202 = vmatpush1.msra.mxu0 %v170
    %203 = vmatprep.subr.mxu0 0.0
    %204 = vmatpush1.msra.mxu0 %v171
    %205 = vmatprep.subr.mxu0 0.0
    %206 = vmatpush1.msra.mxu0 %v172
    %207 = vmatprep.subr.mxu0 0.0
    %208 = vmatpush1.msra.mxu0 %v173
    %209 = vmatprep.subr.mxu0 0.0
    %210 = vmatpush1.msra.mxu0 %v174
    %211 = vmatprep.subr.mxu0 0.0
    %212 = vmatpush1.msra.mxu0 %v175
    %213 = vmatprep.subr.mxu0 0.0
    %214 = vmatpush1.msra.mxu0 %v176
    %215 = vmatprep.subr.mxu0 0.0
    %216 = vmatpush1.msra.mxu0 0.0
    %217 = vmatprep.subr.mxu0 0.0
    %218 = vmatpush1.msra.mxu0 0.0
    %219 = vmatprep.subr.mxu0 0.0
    %220 = vmatpush1.msra.mxu0 0.0
    %221 = vmatprep.subr.mxu0 0.0
    %222 = vmatpush1.msra.mxu0 0.0
    %223 = vmatprep.subr.mxu0 0.0
    %224 = vmatpush1.msra.mxu0 0.0
    %225 = vmatprep.subr.mxu0 0.0
    %226 = vmatpush1.msra.mxu0 0.0
    %227 = vmatprep.subr.mxu0 0.0
    %228 = vmatpush1.msra.mxu0 0.0
    %229 = vmatprep.subr.mxu0 0.0
    %230 = vmatpush1.msra.mxu0 0.0
    %231 = vmatprep.subr.mxu0 0.0
    %232 = vmatpush1.msra.mxu0 0.0
    %233 = vmatprep.subr.mxu0 0.0
    %234 = vmatpush1.msra.mxu0 0.0
    %235 = vmatprep.subr.mxu0 0.0
    %236 = vmatpush1.msra.mxu0 0.0
    %237 = vmatprep.subr.mxu0 0.0
    %238 = vmatpush1.msra.mxu0 0.0
    %239 = vmatprep.subr.mxu0 0.0
    %240 = vmatpush1.msra.mxu0 0.0
    %241 = vmatprep.subr.mxu0 0.0
    %242 = vmatpush1.msra.mxu0 0.0
    %243 = vmatprep.subr.mxu0 0.0
    %244 = vmatpush1.msra.mxu0 0.0
    %245 = vmatprep.subr.mxu0 0.0
    %246 = vmatpush1.msra.mxu0 0.0
    %247 = vmatprep.mubr.f32.mxu0 0.0
    %248 = vmatmul.mubr.f32.gmra.mrb[0].mxu0 %v160
    %v249 = vpop.f32.mrb[0].mxu0
    %v250 = vadd.f32 %v181, %v249
    %v251 = vpop.f32.mrb[0].mxu0
    %252 = vdwg.mxu0
    %253 = vst [vmem:[#allocation8] sm:$0xff] %v250
    // Predicated region
    $region34: #{tpu_custom_call.1} parent=1 // pred_check
      _
    $region35: #{tpu_custom_call.1} parent=1 // pred_check_branch
      %255 = sbr.rel (0) target = $region37
    $region36: #{tpu_custom_call.1} parent=1 // pred_region
      %s257 = ssub.s32 128, 128
      %258 = vsyncadd [#allocation4], %s257
      %s260 = sshll.u32 [#allocation8], 4
      %s261 = int_to_ptr.vmem [resolvable:$true] %s260
      %263 = dma.vmem_to_hbm [thread:$0]  %s261, 128, %s5, [#allocation4]
    $region37: #{tpu_custom_call.1} parent=1 // pred_fallthru
      _
    // Predicated region
    $region38: #{tpu_custom_call.1} parent=1 // pred_check
      _
    $region39: #{tpu_custom_call.1} parent=1 // pred_check_branch
      %265 = sbr.rel (0) target = $region41
    $region40: #{tpu_custom_call.1} parent=1 // pred_region
      %266 = dma.done [#allocation4], 128
    $region41: #{tpu_custom_call.1} parent=1 // pred_fallthru
      _
    %267 = vsyncpa [#allocation3], 1
    %268 = vsyncpa [#allocation6], 1
    %269 = vsyncpa [#allocation4], 1

</llo_original>
